<compile_context>
chip_gen: v7x
topology: tpu7x:2x2x1
jax: 0.10.0
libtpu: 0.0.40
codegen_flags: <defaults>
</compile_context>

<pallas_src>
import jax
import jax.numpy as jnp
from jax.experimental import pallas as pl
from jax.experimental.pallas import tpu as pltpu


def _round_up(x, m):
    return ((x + m - 1) // m) * m


def _sublane(dtype):
    itemsize = jnp.dtype(dtype).itemsize
    return {4: 8, 2: 16, 1: 32}.get(itemsize, 8)


def _linear_kernel(z_ref, w_ref, b_ref, o_ref):
    # Eval-mode dropout is the identity, so the forward pass is the affine
    # map.  w_ref arrives already transposed to [H, tile_o], so this is a
    # plain MXU-friendly [M,K] @ [K,N] contraction with f32 accumulation.
    acc = jnp.dot(z_ref[...], w_ref[...], preferred_element_type=jnp.float32)
    o_ref[...] = (acc + b_ref[...]).astype(o_ref.dtype)


def _vmem_budget_and_limit():
    """Generation-aware VMEM working-set budget and scoped-VMEM limit."""
    try:
        cap = int(pltpu.get_tpu_info().vmem_capacity_bytes)
    except Exception:
        cap = 64 << 20                       # worst case: v7x per-TensorCore
    budget = max(8 << 20, min(cap * 3 // 8, 48 << 20))   # ~24 MiB v7x, 48 MiB v5e/v6e
    limit = max(32 << 20, min(cap - (4 << 20), budget + (16 << 20)))
    return budget, min(limit, cap)


def _choose_tiles(n_rows, h, o_pad, in_bytes, out_bytes, budget_bytes, sublane,
                  num_cores=2):
    """Pick (tile_n, tile_o) against the VMEM budget.

    tile_o: keep the whole weight panel resident when one copy fits half the
    budget; otherwise tile the output dim in 128-lane panels (only possible
    when o_pad is 128-aligned).
    tile_n: largest sublane-aligned row tile whose double-buffered working
    set fits, then capped so the row grid has >=2 steps per TensorCore.
    """
    tile_o = o_pad
    if o_pad % 128 == 0:
        while tile_o > 128 and tile_o * h * in_bytes > budget_bytes // 2:
            tile_o = max(128, _round_up(tile_o // 2, 128))
    # TODO(synk): add a hidden-dim (K) grid axis with an f32 VMEM accumulator
    # (pl.when init/finalize) for very large H where even one 128-wide weight
    # panel exceeds the budget.

    w_bufs = 1 if tile_o == o_pad else 2     # resident panel is single-buffered

    def working_set(t_n):
        return (2 * t_n * h * in_bytes                   # z tile, double-buffered
                + 2 * t_n * tile_o * out_bytes           # out tile, double-buffered
                + w_bufs * h * tile_o * in_bytes         # weight panel(s)
                + w_bufs * max(tile_o, 128) * 4)         # bias panel(s), f32

    tile_n = max(sublane, min(1024, _round_up(n_rows, sublane)))
    while tile_n > sublane and working_set(tile_n) > budget_bytes:
        tile_n = max(sublane, ((tile_n // 2) // sublane) * sublane)

    # >=2 row steps per TensorCore when rows allow (megacore sharding on v7x
    # plus DMA/compute overlap), without dropping tiles below ~256 rows.
    min_row_steps = 2 * num_cores
    if n_rows >= min_row_steps * 256:
        cap = max(256, (pl.cdiv(n_rows, min_row_steps) // sublane) * sublane)
        tile_n = min(tile_n, cap)
    return tile_n, tile_o


def graph_va_decoder_lr(z, weight, bias, dropout=0.0, training=False,
                        compute_dtype=jnp.bfloat16, out_dtype=None,
                        force_pallas=False, return_padded=False):
    """Pallas implementation of GraphVADecoder_LR.forward.

    z:      [N, H]  node embeddings
    weight: [O, H]  torch nn.Linear layout
    bias:   [O]
    Returns [N, O] in `out_dtype` (default: z.dtype).

    Precision contract: inputs are cast to `compute_dtype` (default bf16) for
    the MXU with f32 accumulation; pass compute_dtype=jnp.float32 if full f32
    parity with the torch module is required.
    """
    if training and dropout > 0.0:
        # TODO(synk): training-mode dropout (torch RNG semantics) is not
        # implemented; eval-mode dropout is the identity and is what runs here.
        raise NotImplementedError("training-mode dropout is not implemented")

    N, H = z.shape
    O = weight.shape[0]
    if out_dtype is None:
        out_dtype = z.dtype

    in_bytes = jnp.dtype(compute_dtype).itemsize
    out_bytes = jnp.dtype(out_dtype).itemsize
    sublane = _sublane(compute_dtype)

    # Lane-dense output only when the write amplification stays <= 2x;
    # otherwise keep the unpadded full-extent output block (masked stores but
    # far fewer HBM write bytes, and no wrapper slice pass along O).
    o_pad_full = _round_up(O, 128)
    o_pad = o_pad_full if o_pad_full <= 2 * O else O

    budget, vmem_limit = _vmem_budget_and_limit()
    tile_n, tile_o = _choose_tiles(N, H, o_pad, in_bytes, out_bytes,
                                   budget, sublane)
    n_pad = _round_up(N, tile_n)
    grid = (n_pad // tile_n, o_pad // tile_o)
    n_steps = grid[0] * grid[1]

    hbm_bytes = (n_pad * H * in_bytes + H * o_pad * in_bytes + o_pad * 4
                 + n_pad * o_pad * out_bytes)

    # Small problems: pallas_call launch + pad/slice passes cost more than a
    # fused XLA dot, and a 1-step grid gets no pipelining. Only engage the
    # kernel when there is enough work to amortize per-step overhead.
    if not force_pallas and (n_steps < 2 or hbm_bytes < (2 << 20)):
        zc = z.astype(compute_dtype)
        wc = weight.astype(compute_dtype)
        acc = jax.lax.dot_general(zc, wc, (((1,), (1,)), ((), ())),
                                  preferred_element_type=jnp.float32)
        return (acc + bias.astype(jnp.float32)[None, :]).astype(out_dtype)

    # One-time HBM-side transforms, amortized over the whole grid.
    zc = z.astype(compute_dtype)
    if n_pad != N:
        zc = jnp.pad(zc, ((0, n_pad - N), (0, 0)))
    wc = weight.astype(compute_dtype).T              # [H, O]: standard MXU feed
    bc = bias.astype(jnp.float32)
    if o_pad != O:
        wc = jnp.pad(wc, ((0, 0), (0, o_pad - O)))
        bc = jnp.pad(bc, (0, o_pad - O))
    bc = bc.reshape(1, o_pad)

    cost = pl.CostEstimate(
        flops=2 * n_pad * H * o_pad,
        transcendentals=0,
        bytes_accessed=hbm_bytes,
    )

    resident_w = (grid[1] == 1)

    def run(single_buffer_residents):
        res_kw = ({"pipeline_mode": pl.Buffered(1)}
                  if single_buffer_residents else {})
        in_specs = [
            pl.BlockSpec((tile_n, H), lambda i, j: (i, 0)),            # z row tile
            pl.BlockSpec((H, tile_o), lambda i, j: (0, j), **res_kw),  # weight panel
            pl.BlockSpec((1, tile_o), lambda i, j: (0, j), **res_kw),  # bias panel
        ]
        out_spec = pl.BlockSpec((tile_n, tile_o), lambda i, j: (i, j))
        return pl.pallas_call(
            _linear_kernel,
            out_shape=jax.ShapeDtypeStruct((n_pad, o_pad), out_dtype),
            grid_spec=pltpu.PrefetchScalarGridSpec(
                num_scalar_prefetch=0,
                grid=grid,
                in_specs=in_specs,
                out_specs=out_spec,
            ),
            compiler_params=pltpu.CompilerParams(
                dimension_semantics=("parallel", "parallel"),
                vmem_limit_bytes=int(vmem_limit),
            ),
            cost_estimate=cost,
        )(zc, wc, bc)

    if resident_w:
        try:
            out = run(True)        # single-buffered resident weight/bias
        except Exception:
            out = run(False)       # runtime rejected Buffered(1): default 2-deep
    else:
        out = run(False)           # weight panels are pipelined over the O axis

    if return_padded:
        return out                 # let the consumer fuse the slice if desired
    if n_pad != N or o_pad != O:
        out = out[:N, :O]
    return out


if __name__ == "__main__":
    # Node-classification decoder: N nodes, hidden_dim -> output_dim.
    # N=1024 gives a 4-step row grid (>=2 steps per TensorCore on v7x).
    N, HIDDEN_DIM, OUTPUT_DIM = 1024, 32, 16
    DROPOUT = 0.5   # inert in eval mode

    key = jax.random.PRNGKey(0)
    kz, kw, kb = jax.random.split(key, 3)

    z = jax.random.normal(kz, (N, HIDDEN_DIM), dtype=jnp.float32)
    # Deterministic synthetic parameter init (not a checkpoint load).
    weight = jax.random.normal(kw, (OUTPUT_DIM, HIDDEN_DIM), dtype=jnp.float32) * 0.1
    bias = jax.random.normal(kb, (OUTPUT_DIM,), dtype=jnp.float32) * 0.1

    out = graph_va_decoder_lr(z, weight, bias, dropout=DROPOUT,
                              training=False, force_pallas=True)
    out = jax.block_until_ready(out)
    assert out.shape == (N, OUTPUT_DIM), out.shape

    # Reference with identical bf16 casts + f32 accumulation (same MXU path).
    ref_bf16 = jax.lax.dot_general(
        z.astype(jnp.bfloat16), weight.astype(jnp.bfloat16),
        (((1,), (1,)), ((), ())), preferred_element_type=jnp.float32,
    ) + bias[None, :]
    assert jnp.allclose(out, ref_bf16.astype(out.dtype), atol=1e-2, rtol=1e-2), \
        "mismatch vs bf16 reference"

    # Loose sanity check against the full-f32 torch forward.
    ref_f32 = z @ weight.T + bias
    assert jnp.allclose(out, ref_f32, atol=5e-2, rtol=5e-2), \
        "mismatch vs f32 reference"

    print("KERNEL_OK")
</pallas_src>

<mosaic_0001>
module attributes {stable_mosaic.version = 11 : i64} {
  func.func @_linear_kernel(%arg0: i32, %arg1: i32, %arg2: memref<256x32xbf16, #tpu.memory_space<vmem>>, %arg3: memref<32x16xbf16, #tpu.memory_space<vmem>>, %arg4: memref<1x16xf32, #tpu.memory_space<vmem>>, %arg5: memref<256x16xf32, #tpu.memory_space<vmem>>) attributes {dimension_semantics = [#tpu.dimension_semantics<parallel>, #tpu.dimension_semantics<parallel>], iteration_bounds = array<i64: 4, 1>, scalar_prefetch = 0 : i64, scratch_operands = 0 : i64, tpu.core_type = #tpu.core_type<tc>, window_params = [{transform_indices = @transform_0, window_bounds = array<i64: 256, 32>}, {pipeline_mode = #tpu.pipeline_mode<synchronous>, transform_indices = @transform_1, window_bounds = array<i64: 32, 16>}, {pipeline_mode = #tpu.pipeline_mode<synchronous>, transform_indices = @transform_2, window_bounds = array<i64: 1, 16>}, {transform_indices = @transform_3, window_bounds = array<i64: 256, 16>}]} {
    %c0 = arith.constant 0 : index
    %c0_0 = arith.constant 0 : index
    %0 = vector.load %arg2[%c0, %c0_0] : memref<256x32xbf16, #tpu.memory_space<vmem>>, vector<256x32xbf16>
    %c0_1 = arith.constant 0 : index
    %c0_2 = arith.constant 0 : index
    %1 = vector.load %arg3[%c0_1, %c0_2] : memref<32x16xbf16, #tpu.memory_space<vmem>>, vector<32x16xbf16>
    %cst = arith.constant dense<0.000000e+00> : vector<256x16xf32>
    %2 = tpu.matmul %0, %1, %cst {dimension_numbers = #tpu.dot_dimension_numbers<[1], [0], [0], [1], [0, 0, 1, 1], [], []>} : vector<256x32xbf16>, vector<32x16xbf16>, vector<256x16xf32> -> vector<256x16xf32>
    %c0_3 = arith.constant 0 : index
    %c0_4 = arith.constant 0 : index
    %3 = vector.load %arg4[%c0_3, %c0_4] : memref<1x16xf32, #tpu.memory_space<vmem>>, vector<1x16xf32>
    %4 = vector.broadcast %3 : vector<1x16xf32> to vector<256x16xf32>
    %5 = arith.addf %2, %4 : vector<256x16xf32>
    %c0_5 = arith.constant 0 : index
    %c0_6 = arith.constant 0 : index
    %6 = vector.load %arg5[%c0_5, %c0_6] : memref<256x16xf32, #tpu.memory_space<vmem>>, vector<256x16xf32>
    tpu.vector_store %arg5[%c0_5, %c0_6], %5 {strides = array<i32>} : memref<256x16xf32, #tpu.memory_space<vmem>>, vector<256x16xf32>,
    return
  }
  func.func @transform_0(%arg0: i32, %arg1: i32) -> (i32, i32) {
    %c0_i32 = arith.constant 0 : i32
    %c0_i32_0 = arith.constant 0 : i32
    return %arg0, %c0_i32 : i32, i32
  }
  func.func @transform_1(%arg0: i32, %arg1: i32) -> (i32, i32) {
    %c0_i32 = arith.constant 0 : i32
    %c0_i32_0 = arith.constant 0 : i32
    return %c0_i32, %arg1 : i32, i32
  }
  func.func @transform_2(%arg0: i32, %arg1: i32) -> (i32, i32) {
    %c0_i32 = arith.constant 0 : i32
    %c0_i32_0 = arith.constant 0 : i32
    return %c0_i32, %arg1 : i32, i32
  }
  func.func @transform_3(%arg0: i32, %arg1: i32) -> (i32, i32) {
    %c0_i32 = arith.constant 0 : i32
    return %arg0, %arg1 : i32, i32
  }
}

module attributes {stable_mosaic.version = 11 : i64} {
  func.func @_linear_kernel(%arg0: i32, %arg1: i32, %arg2: memref<256x32xbf16, #tpu.memory_space<vmem>>, %arg3: memref<32x16xbf16, #tpu.memory_space<vmem>>, %arg4: memref<1x16xf32, #tpu.memory_space<vmem>>, %arg5: memref<256x16xf32, #tpu.memory_space<vmem>>) attributes {dimension_semantics = [#tpu.dimension_semantics<parallel>, #tpu.dimension_semantics<parallel>], iteration_bounds = array<i64: 4, 1>, scalar_prefetch = 0 : i64, scratch_operands = 0 : i64, tpu.core_type = #tpu.core_type<tc>, window_params = [{transform_indices = @transform_0, window_bounds = array<i64: 256, 32>}, {transform_indices = @transform_1, window_bounds = array<i64: 32, 16>}, {transform_indices = @transform_2, window_bounds = array<i64: 1, 16>}, {transform_indices = @transform_3, window_bounds = array<i64: 256, 16>}]} {
    %c0 = arith.constant 0 : index
    %c0_0 = arith.constant 0 : index
    %0 = vector.load %arg2[%c0, %c0_0] : memref<256x32xbf16, #tpu.memory_space<vmem>>, vector<256x32xbf16>
    %c0_1 = arith.constant 0 : index
    %c0_2 = arith.constant 0 : index
    %1 = vector.load %arg3[%c0_1, %c0_2] : memref<32x16xbf16, #tpu.memory_space<vmem>>, vector<32x16xbf16>
    %cst = arith.constant dense<0.000000e+00> : vector<256x16xf32>
    %2 = tpu.matmul %0, %1, %cst {dimension_numbers = #tpu.dot_dimension_numbers<[1], [0], [0], [1], [0, 0, 1, 1], [], []>} : vector<256x32xbf16>, vector<32x16xbf16>, vector<256x16xf32> -> vector<256x16xf32>
    %c0_3 = arith.constant 0 : index
    %c0_4 = arith.constant 0 : index
    %3 = vector.load %arg4[%c0_3, %c0_4] : memref<1x16xf32, #tpu.memory_space<vmem>>, vector<1x16xf32>
    %4 = vector.broadcast %3 : vector<1x16xf32> to vector<256x16xf32>
    %5 = arith.addf %2, %4 : vector<256x16xf32>
    %c0_5 = arith.constant 0 : index
    %c0_6 = arith.constant 0 : index
    %6 = vector.load %arg5[%c0_5, %c0_6] : memref<256x16xf32, #tpu.memory_space<vmem>>, vector<256x16xf32>
    tpu.vector_store %arg5[%c0_5, %c0_6], %5 {strides = array<i32>} : memref<256x16xf32, #tpu.memory_space<vmem>>, vector<256x16xf32>,
    return
  }
  func.func @transform_0(%arg0: i32, %arg1: i32) -> (i32, i32) {
    %c0_i32 = arith.constant 0 : i32
    %c0_i32_0 = arith.constant 0 : i32
    return %arg0, %c0_i32 : i32, i32
  }
  func.func @transform_1(%arg0: i32, %arg1: i32) -> (i32, i32) {
    %c0_i32 = arith.constant 0 : i32
    %c0_i32_0 = arith.constant 0 : i32
    return %c0_i32, %arg1 : i32, i32
  }
  func.func @transform_2(%arg0: i32, %arg1: i32) -> (i32, i32) {
    %c0_i32 = arith.constant 0 : i32
    %c0_i32_0 = arith.constant 0 : i32
    return %c0_i32, %arg1 : i32, i32
  }
  func.func @transform_3(%arg0: i32, %arg1: i32) -> (i32, i32) {
    %c0_i32 = arith.constant 0 : i32
    return %arg0, %arg1 : i32, i32
  }
}

</mosaic_0001>

<llo_original>
// kernel: tpu_custom_call.1
$region0: #{tpu_custom_call.1}
  #allocation0 [shape = 'u32[]', space=smem, size = 0x4, offset = 0x4, fixed_abs, tag = 'smem constant byte address 0x4 - core index']
  #allocation1 [shape = 'u32[144,128]{1,0:T(1,128)}', space=vmem, size = 0x12000, scoped, tag = 'internal scratch']
  %s0 = inlined_call_operand.vmem [shape: bf16[1024,32], index: 0, kind: input, shape index: {}]
  %s1 = inlined_call_operand.vmem [shape: bf16[32,16], index: 1, kind: input, shape index: {}]
  %s2 = inlined_call_operand.vmem [shape: f32[1,16], index: 2, kind: input, shape index: {}]
  %s3 = inlined_call_operand.vmem [shape: f32[1024,16], index: 3, kind: output, shape index: {}]
  %s4 = sld [smem:[#allocation0]]
  $region45: #{tpu_custom_call.1} parent=0
    _
  %s6 = ssub.s32 1, %s4
  %s7 = scalar_select 0, %s6, %s4
  loop: start=0, step=1, limit=6
  $region2: #{tpu_custom_call.1} parent=0 // loop_pre_header
    _
  $region3: #{tpu_custom_call.1} parent=0 // loop_header
    %s9 = sphi 0, %s13
    %p10 = scmp.ge.s32.totalorder %s9, 6
    %s16 = sphi 0, %s28
    %s17 = sphi 0, %s24
    %s18 = sphi 0, %s16
    %s19 = sphi 0, %s17
    %s20 = sphi 0, %s18
    %s21 = sphi 0, %s19
    %s31 = sphi 0, %s33
    %s34 = sphi 0, %s31
    %s35 = sphi 0, %s34
    %s51 = sphi 0, %s35
    %s57 = sphi 0, %s59
    %s60 = sphi 0, %s57
    %s61 = sphi 0, %s60
    %s77 = sphi 0, %s61
    %s83 = sphi 0, %s85
    %s86 = sphi 0, %s83
    %s87 = sphi 0, %s86
    %s103 = sphi 0, %s87
    %s111 = sphi 0, %s113
    %s114 = sphi 0, %s111
    %s115 = sphi 0, %s114
    %s131 = sphi 0, %s115
  $region4: #{tpu_custom_call.1} parent=0 // loop_header_branch
    %12 = sbr.rel (%p10) target = $region8
  $region5: #{tpu_custom_call.1} parent=0 // loop_body
    %s14 = ssub.s32 %s9, 1
    %s15 = ssub.s32 %s9, 2
    %s22 = sadd.s32 1, %s17
    %p23 = scmp.ge.s32.totalorder %s22, 1
    %s24 = scalar_select %p23, 0, %s22
    %s25 = sadd.s32 1, %s16
    %s26 = scalar_select %p23, %s25, %s16
    %p27 = scmp.ge.s32.totalorder %s26, 4
    %s28 = scalar_select %p27, 0, %s26
    %s29 = ssub.s32 %s16, %s28
    %p30 = scmp.eq.s32.totalorder %s29, 0
    %s32 = sadd.s32 %s31, 1
    %s33 = scalar_select %p30, %s31, %s32
    %p36 = pneg %p30
    %p37 = scmp.eq.s32.totalorder %s9, 3
    %p38 = por %p36, %p37
    %p39 = scmp.ne.s32.totalorder %s31, %s34
    %p40 = scmp.eq.s32.totalorder %s9, 0
    %p41 = por %p39, %p40
    %p42 = scmp.ne.s32.totalorder %s31, %s34
    %p43 = scmp.eq.s32.totalorder %s14, 3
    %p44 = por %p42, %p43
    %p45 = scmp.ne.s32.totalorder %s34, %s35
    %p46 = scmp.eq.s32.totalorder %s14, 0
    %p47 = por %p45, %p46
    %p48 = scmp.ne.s32.totalorder %s34, %s35
    %p49 = scmp.eq.s32.totalorder %s15, 3
    %p50 = por %p48, %p49
    %p52 = scmp.ne.s32.totalorder %s35, %s51
    %p53 = scmp.eq.s32.totalorder %s15, 0
    %p54 = por %p52, %p53
    %s55 = ssub.s32 %s17, %s24
    %p56 = scmp.eq.s32.totalorder %s55, 0
    %s58 = sadd.s32 %s57, 1
    %s59 = scalar_select %p56, %s57, %s58
    %p62 = pneg %p56
    %p63 = scmp.eq.s32.totalorder %s9, 3
    %p64 = por %p62, %p63
    %p65 = scmp.ne.s32.totalorder %s57, %s60
    %p66 = scmp.eq.s32.totalorder %s9, 0
    %p67 = por %p65, %p66
    %p68 = scmp.ne.s32.totalorder %s57, %s60
    %p69 = scmp.eq.s32.totalorder %s14, 3
    %p70 = por %p68, %p69
    %p71 = scmp.ne.s32.totalorder %s60, %s61
    %p72 = scmp.eq.s32.totalorder %s14, 0
    %p73 = por %p71, %p72
    %p74 = scmp.ne.s32.totalorder %s60, %s61
    %p75 = scmp.eq.s32.totalorder %s15, 3
    %p76 = por %p74, %p75
    %p78 = scmp.ne.s32.totalorder %s61, %s77
    %p79 = scmp.eq.s32.totalorder %s15, 0
    %p80 = por %p78, %p79
    %s81 = ssub.s32 %s17, %s24
    %p82 = scmp.eq.s32.totalorder %s81, 0
    %s84 = sadd.s32 %s83, 1
    %s85 = scalar_select %p82, %s83, %s84
    %p88 = pneg %p82
    %p89 = scmp.eq.s32.totalorder %s9, 3
    %p90 = por %p88, %p89
    %p91 = scmp.ne.s32.totalorder %s83, %s86
    %p92 = scmp.eq.s32.totalorder %s9, 0
    %p93 = por %p91, %p92
    %p94 = scmp.ne.s32.totalorder %s83, %s86
    %p95 = scmp.eq.s32.totalorder %s14, 3
    %p96 = por %p94, %p95
    %p97 = scmp.ne.s32.totalorder %s86, %s87
    %p98 = scmp.eq.s32.totalorder %s14, 0
    %p99 = por %p97, %p98
    %p100 = scmp.ne.s32.totalorder %s86, %s87
    %p101 = scmp.eq.s32.totalorder %s15, 3
    %p102 = por %p100, %p101
    %p104 = scmp.ne.s32.totalorder %s87, %s103
    %p105 = scmp.eq.s32.totalorder %s15, 0
    %p106 = por %p104, %p105
    %s107 = ssub.s32 %s16, %s28
    %s108 = ssub.s32 %s17, %s24
    %s109 = sor.u32 %s107, %s108
    %p110 = scmp.eq.s32.totalorder %s109, 0
    %s112 = sadd.s32 %s111, 1
    %s113 = scalar_select %p110, %s111, %s112
    %p116 = pneg %p110
    %p117 = scmp.eq.s32.totalorder %s9, 3
    %p118 = por %p116, %p117
    %p119 = scmp.ne.s32.totalorder %s111, %s114
    %p120 = scmp.eq.s32.totalorder %s9, 0
    %p121 = por %p119, %p120
    %p122 = scmp.ne.s32.totalorder %s111, %s114
    %p123 = scmp.eq.s32.totalorder %s14, 3
    %p124 = por %p122, %p123
    %p125 = scmp.ne.s32.totalorder %s114, %s115
    %p126 = scmp.eq.s32.totalorder %s14, 0
    %p127 = por %p125, %p126
    %p128 = scmp.ne.s32.totalorder %s114, %s115
    %p129 = scmp.eq.s32.totalorder %s15, 3
    %p130 = por %p128, %p129
    %p132 = scmp.ne.s32.totalorder %s115, %s131
    %p133 = scmp.eq.s32.totalorder %s15, 0
    %p134 = por %p132, %p133
    %p135 = scmp.le.s32.totalorder 1, %s9
    %p136 = scmp.lt.s32.totalorder %s9, 5
    %p137 = pnand %p135, %p136
    %p138 = pneg %p137
    // Predicated region
    $region9: #{tpu_custom_call.1} parent=5 // pred_check
      _
    $region10: #{tpu_custom_call.1} parent=5 // pred_check_branch
      %140 = sbr.rel (%p137) target = $region12
    $region11: #{tpu_custom_call.1} parent=5 // pred_region
      %s141 = ssub.s32 %s9, 1
      // Predicated region
      $region13: #{tpu_custom_call.1} parent=11 // pred_check
        %p142 = pneg %p73
      $region14: #{tpu_custom_call.1} parent=11 // pred_check_branch
        %144 = sbr.rel (%p142) target = $region16
      $region15: #{tpu_custom_call.1} parent=11 // pred_region
        %p145 = scmp.lt.s32.totalorder %s19, 0
        %s146 = scalar_select %p145, %s19, 0
        %s147 = smul.addr %s146, 4
        %s148 = scalar_lea.vmem %s1, %s147
      $region16: #{tpu_custom_call.1} parent=11 // pred_fallthru
        _
      // Predicated region
      $region17: #{tpu_custom_call.1} parent=11 // pred_check
        %p149 = pneg %p99
      $region18: #{tpu_custom_call.1} parent=11 // pred_check_branch
        %151 = sbr.rel (%p149) target = $region20
      $region19: #{tpu_custom_call.1} parent=11 // pred_region
        %p152 = scmp.lt.s32.totalorder %s19, 0
        %s153 = scalar_select %p152, %s19, 0
        %s154 = scalar_lea.vmem %s2, %s153
      $region20: #{tpu_custom_call.1} parent=11 // pred_fallthru
        _
    $region12: #{tpu_custom_call.1} parent=5 // pred_fallthru
      _
    %p155 = scmp.lt.s32.totalorder %s9, 4
    // Predicated region
    $region21: #{tpu_custom_call.1} parent=5 // pred_check
      %p156 = pneg %p155
    $region22: #{tpu_custom_call.1} parent=5 // pred_check_branch
      %158 = sbr.rel (%p156) target = $region24
    $region23: #{tpu_custom_call.1} parent=5 // pred_region
      // Predicated region
      $region25: #{tpu_custom_call.1} parent=23 // pred_check
        %p159 = pneg %p41
      $region26: #{tpu_custom_call.1} parent=23 // pred_check_branch
        %161 = sbr.rel (%p159) target = $region28
      $region27: #{tpu_custom_call.1} parent=23 // pred_region
        %s162 = smul.u32 32, %s16
        %p163 = scmp.lt.s32.totalorder %s162, 127
        %s164 = scalar_select %p163, %s162, 127
        %s165 = smul.addr %s164, 4
        %s166 = scalar_lea.vmem %s0, %s165
        %s167 = smul.u32 32, %s16
      $region28: #{tpu_custom_call.1} parent=23 // pred_fallthru
        _
    $region24: #{tpu_custom_call.1} parent=5 // pred_fallthru
      _
    %p168 = scmp.le.s32.totalorder 1, %s9
    %p169 = scmp.lt.s32.totalorder %s9, 5
    %p170 = pnand %p168, %p169
    %p171 = pneg %p170
    // Predicated region
    $region29: #{tpu_custom_call.1} parent=5 // pred_check
      _
    $region30: #{tpu_custom_call.1} parent=5 // pred_check_branch
      %173 = sbr.rel (%p170) target = $region32
    $region31: #{tpu_custom_call.1} parent=5 // pred_region
      %s174 = ssub.s32 %s9, 1
      %s175 = smul.u32 32, %s18
      %p176 = scmp.lt.s32.totalorder %s175, 127
      %s177 = scalar_select %p176, %s175, 127
      %s178 = smul.addr %s177, 4
      %s179 = scalar_lea.vmem %s0, %s178
      %p180 = pneg %p47
      %p181 = pneg %p44
      %p182 = scmp.lt.s32.totalorder %s19, 0
      %s183 = scalar_select %p182, %s19, 0
      %s184 = smul.addr %s183, 4
      %s185 = scalar_lea.vmem %s1, %s184
      %p186 = pneg %p73
      %p187 = pneg %p70
      %p188 = scmp.lt.s32.totalorder %s19, 0
      %s189 = scalar_select %p188, %s19, 0
      %s190 = scalar_lea.vmem %s2, %s189
      %p191 = pneg %p99
      %p192 = pneg %p96
      %p193 = pneg %p127
      %p194 = pneg %p124
      %s195 = smul.u32 32, %s18
      %p196 = scmp.lt.s32.totalorder %s195, 127
      %s197 = scalar_select %p196, %s195, 127
      %p198 = scmp.lt.s32.totalorder %s19, 0
      %s199 = scalar_select %p198, %s19, 0
      %s200 = sadd.s32 %s199, %s197
      %s201 = smul.addr %s200, 8
      %s202 = scalar_lea.vmem %s3, %s201
      %s203 = smul.u32 32, %s18
      %p204 = scmp.lt.s32.totalorder %s203, 127
      %s205 = scalar_select %p204, %s203, 127
      %s206 = smul.addr %s205, 4
      %s207 = scalar_lea.vmem %s0, %s206
      %s208 = smul.u32 32, %s18
      %p209 = scmp.lt.s32.totalorder %s19, 0
      %s210 = scalar_select %p209, %s19, 0
      %s211 = smul.addr %s210, 4
      %s212 = scalar_lea.vmem %s1, %s211
      %p213 = scmp.lt.s32.totalorder %s19, 0
      %s214 = scalar_select %p213, %s19, 0
      %s215 = scalar_lea.vmem %s2, %s214
      %s216 = smul.u32 32, %s18
      %p217 = scmp.lt.s32.totalorder %s216, 127
      %s218 = scalar_select %p217, %s216, 127
      %p219 = scmp.lt.s32.totalorder %s19, 0
      %s220 = scalar_select %p219, %s19, 0
      %s221 = sadd.s32 %s220, %s218
      %s222 = smul.addr %s221, 8
      %s223 = scalar_lea.vmem %s3, %s222
      %s224 = smul.u32 32, %s18
      %v226 = vld [vmem:[%s207] sm:$0xf]
      %v227 = vld [vmem:[%s207 + $0x4] sm:$0xf]
      %v228 = vld [vmem:[%s207 + $0x8] sm:$0xf]
      %v229 = vld [vmem:[%s207 + $0xc] sm:$0xf]
      %v230 = vld [vmem:[%s207 + $0x10] sm:$0xf]
      %v231 = vld [vmem:[%s207 + $0x14] sm:$0xf]
      %v232 = vld [vmem:[%s207 + $0x18] sm:$0xf]
      %v233 = vld [vmem:[%s207 + $0x1c] sm:$0xf]
      %v234 = vld [vmem:[%s207 + $0x20] sm:$0xf]
      %v235 = vld [vmem:[%s207 + $0x24] sm:$0xf]
      %v236 = vld [vmem:[%s207 + $0x28] sm:$0xf]
      %v237 = vld [vmem:[%s207 + $0x2c] sm:$0xf]
      %v238 = vld [vmem:[%s207 + $0x30] sm:$0xf]
      %v239 = vld [vmem:[%s207 + $0x34] sm:$0xf]
      %v240 = vld [vmem:[%s207 + $0x38] sm:$0xf]
      %v241 = vld [vmem:[%s207 + $0x3c] sm:$0xf]
      %v242 = vld [vmem:[%s207 + $0x40] sm:$0xf]
      %v243 = vld [vmem:[%s207 + $0x44] sm:$0xf]
      %v244 = vld [vmem:[%s207 + $0x48] sm:$0xf]
      %v245 = vld [vmem:[%s207 + $0x4c] sm:$0xf]
      %v246 = vld [vmem:[%s207 + $0x50] sm:$0xf]
      %v247 = vld [vmem:[%s207 + $0x54] sm:$0xf]
      %v248 = vld [vmem:[%s207 + $0x58] sm:$0xf]
      %v249 = vld [vmem:[%s207 + $0x5c] sm:$0xf]
      %v250 = vld [vmem:[%s207 + $0x60] sm:$0xf]
      %v251 = vld [vmem:[%s207 + $0x64] sm:$0xf]
      %v252 = vld [vmem:[%s207 + $0x68] sm:$0xf]
      %v253 = vld [vmem:[%s207 + $0x6c] sm:$0xf]
      %v254 = vld [vmem:[%s207 + $0x70] sm:$0xf]
      %v255 = vld [vmem:[%s207 + $0x74] sm:$0xf]
      %v256 = vld [vmem:[%s207 + $0x78] sm:$0xf]
      %v257 = vld [vmem:[%s207 + $0x7c] sm:$0xf]
      %v258 = vld [vmem:[%s212] sm:$0xf]
      %v259 = vld [vmem:[%s212 + $0x4] sm:$0xf]
      %v260 = vld [vmem:[%s212 + $0x8] sm:$0xf]
      %v261 = vld [vmem:[%s212 + $0xc] sm:$0xf]
      %v262 = vld [vmem:[%s215] sm:$0x1]
      %v264 = vlaneseq
      %v265 = vshrl.u32 %v264, 7
      %v266 = vsub.s32 0, %v265
      %v267 = vrot.slane %v262, %v266
      %v301 = vunpack.c.l.b16 %v226
      %v302 = vunpack.c.l.b16 %v227
      %v303 = vunpack.c.l.b16 %v228
      %v304 = vunpack.c.l.b16 %v229
      %v305 = vunpack.c.l.b16 %v230
      %v306 = vunpack.c.l.b16 %v231
      %v307 = vunpack.c.l.b16 %v232
      %v308 = vunpack.c.l.b16 %v233
      %v309 = vunpack.c.l.b16 %v234
      %v310 = vunpack.c.l.b16 %v235
      %v311 = vunpack.c.l.b16 %v236
      %v312 = vunpack.c.l.b16 %v237
      %v313 = vunpack.c.l.b16 %v238
      %v314 = vunpack.c.l.b16 %v239
      %v315 = vunpack.c.l.b16 %v240
      %v316 = vunpack.c.l.b16 %v241
      %v317 = vunpack.c.l.b16 %v242
      %v318 = vunpack.c.l.b16 %v243
      %v319 = vunpack.c.l.b16 %v244
      %v320 = vunpack.c.l.b16 %v245
      %v321 = vunpack.c.l.b16 %v246
      %v322 = vunpack.c.l.b16 %v247
      %v323 = vunpack.c.l.b16 %v248
      %v324 = vunpack.c.l.b16 %v249
      %v325 = vunpack.c.l.b16 %v250
      %v326 = vunpack.c.l.b16 %v251
      %v327 = vunpack.c.l.b16 %v252
      %v328 = vunpack.c.l.b16 %v253
      %v329 = vunpack.c.l.b16 %v254
      %v330 = vunpack.c.l.b16 %v255
      %v331 = vunpack.c.l.b16 %v256
      %v332 = vunpack.c.l.b16 %v257
      %v333 = vpack.c.b16 %v302, %v301
      %v334 = vpack.c.b16 %v304, %v303
      %v335 = vpack.c.b16 %v306, %v305
      %v336 = vpack.c.b16 %v308, %v307
      %v337 = vpack.c.b16 %v310, %v309
      %v338 = vpack.c.b16 %v312, %v311
      %v339 = vpack.c.b16 %v314, %v313
      %v340 = vpack.c.b16 %v316, %v315
      %v341 = vpack.c.b16 %v318, %v317
      %v342 = vpack.c.b16 %v320, %v319
      %v343 = vpack.c.b16 %v322, %v321
      %v344 = vpack.c.b16 %v324, %v323
      %v345 = vpack.c.b16 %v326, %v325
      %v346 = vpack.c.b16 %v328, %v327
      %v347 = vpack.c.b16 %v330, %v329
      %v348 = vpack.c.b16 %v332, %v331
      %v353 = vunpack.c.l.b16 %v258
      %v354 = vunpack.c.l.b16 %v259
      %v355 = vunpack.c.l.b16 %v260
      %v356 = vunpack.c.l.b16 %v261
      %v357 = vpack.c.b16 %v354, %v353
      %v358 = vpack.c.b16 %v356, %v355
      %vm361 = vcmask 261120
      %v363 = vsel %vm361, %v333, 0
      %v366 = vsel %vm361, %v334, 0
      %v369 = vsel %vm361, %v335, 0
      %v372 = vsel %vm361, %v336, 0
      %v375 = vsel %vm361, %v337, 0
      %v378 = vsel %vm361, %v338, 0
      %v381 = vsel %vm361, %v339, 0
      %v384 = vsel %vm361, %v340, 0
      %v387 = vsel %vm361, %v341, 0
      %v390 = vsel %vm361, %v342, 0
      %v393 = vsel %vm361, %v343, 0
      %v396 = vsel %vm361, %v344, 0
      %v399 = vsel %vm361, %v345, 0
      %v402 = vsel %vm361, %v346, 0
      %v405 = vsel %vm361, %v347, 0
      %v408 = vsel %vm361, %v348, 0
      %410 = vmatprep.subr.bf16.mxu0 0
      %411 = vmatpush1.bf16.msra.mxu0 %v357
      %412 = vmatprep.subr.bf16.mxu0 0
      %413 = vmatpush1.bf16.msra.mxu0 %v358
      %414 = vmatprep.subr.bf16.mxu0 0
      %415 = vmatpush1.bf16.msra.mxu0 0
      %416 = vmatprep.subr.bf16.mxu0 0
      %417 = vmatpush1.bf16.msra.mxu0 0
      %418 = vmatprep.subr.bf16.mxu0 0
      %419 = vmatpush1.bf16.msra.mxu0 0
      %420 = vmatprep.subr.bf16.mxu0 0
      %421 = vmatpush1.bf16.msra.mxu0 0
      %422 = vmatprep.subr.bf16.mxu0 0
      %423 = vmatpush1.bf16.msra.mxu0 0
      %424 = vmatprep.subr.bf16.mxu0 0
      %425 = vmatpush1.bf16.msra.mxu0 0
      %426 = vmatprep.subr.bf16.mxu0 0
      %427 = vmatpush1.bf16.msra.mxu0 0
      %428 = vmatprep.subr.bf16.mxu0 0
      %429 = vmatpush1.bf16.msra.mxu0 0
      %430 = vmatprep.subr.bf16.mxu0 0
      %431 = vmatpush1.bf16.msra.mxu0 0
      %432 = vmatprep.subr.bf16.mxu0 0
      %433 = vmatpush1.bf16.msra.mxu0 0
      %434 = vmatprep.subr.bf16.mxu0 0
      %435 = vmatpush1.bf16.msra.mxu0 0
      %436 = vmatprep.subr.bf16.mxu0 0
      %437 = vmatpush1.bf16.msra.mxu0 0
      %438 = vmatprep.subr.bf16.mxu0 0
      %439 = vmatpush1.bf16.msra.mxu0 0
      %440 = vmatprep.subr.bf16.mxu0 0
      %441 = vmatpush1.bf16.msra.mxu0 0
      %442 = vmatprep.mubr.bf16.mxu0 0
      %443 = vmatmul.mubr.bf16.gmra.mrb[0].mxu0 %v363
      %v444 = vpop.f32.mrb[0].mxu0
      %v445 = vadd.f32 %v267, %v444
      %v446 = vpop.f32.mrb[0].mxu0
      %v447 = vpop.f32.mrb[0].mxu0
      %v448 = vadd.f32 %v267, %v447
      %v449 = vpop.f32.mrb[0].mxu0
      %450 = vmatprep.mubr.bf16.mxu0 0
      %451 = vmatmul.mubr.bf16.gmra.mrb[0].mxu0 %v366
      %v452 = vpop.f32.mrb[0].mxu0
      %v453 = vadd.f32 %v267, %v452
      %v454 = vpop.f32.mrb[0].mxu0
      %v455 = vpop.f32.mrb[0].mxu0
      %v456 = vadd.f32 %v267, %v455
      %v457 = vpop.f32.mrb[0].mxu0
      %458 = vmatprep.mubr.bf16.mxu0 0
      %459 = vmatmul.mubr.bf16.gmra.mrb[0].mxu0 %v369
      %v460 = vpop.f32.mrb[0].mxu0
      %v461 = vadd.f32 %v267, %v460
      %v462 = vpop.f32.mrb[0].mxu0
      %v463 = vpop.f32.mrb[0].mxu0
      %v464 = vadd.f32 %v267, %v463
      %v465 = vpop.f32.mrb[0].mxu0
      %466 = vmatprep.mubr.bf16.mxu0 0
      %467 = vmatmul.mubr.bf16.gmra.mrb[0].mxu0 %v372
      %v468 = vpop.f32.mrb[0].mxu0
      %v469 = vadd.f32 %v267, %v468
      %v470 = vpop.f32.mrb[0].mxu0
      %v471 = vpop.f32.mrb[0].mxu0
      %v472 = vadd.f32 %v267, %v471
      %v473 = vpop.f32.mrb[0].mxu0
      %474 = vmatprep.mubr.bf16.mxu0 0
      %475 = vmatmul.mubr.bf16.gmra.mrb[0].mxu0 %v375
      %v476 = vpop.f32.mrb[0].mxu0
      %v477 = vadd.f32 %v267, %v476
      %v478 = vpop.f32.mrb[0].mxu0
      %v479 = vpop.f32.mrb[0].mxu0
      %v480 = vadd.f32 %v267, %v479
      %v481 = vpop.f32.mrb[0].mxu0
      %482 = vmatprep.mubr.bf16.mxu0 0
      %483 = vmatmul.mubr.bf16.gmra.mrb[0].mxu0 %v378
      %v484 = vpop.f32.mrb[0].mxu0
      %v485 = vadd.f32 %v267, %v484
      %v486 = vpop.f32.mrb[0].mxu0
      %v487 = vpop.f32.mrb[0].mxu0
      %v488 = vadd.f32 %v267, %v487
      %v489 = vpop.f32.mrb[0].mxu0
      %490 = vmatprep.mubr.bf16.mxu0 0
      %491 = vmatmul.mubr.bf16.gmra.mrb[0].mxu0 %v381
      %v492 = vpop.f32.mrb[0].mxu0
      %v493 = vadd.f32 %v267, %v492
      %v494 = vpop.f32.mrb[0].mxu0
      %v495 = vpop.f32.mrb[0].mxu0
      %v496 = vadd.f32 %v267, %v495
      %v497 = vpop.f32.mrb[0].mxu0
      %498 = vmatprep.mubr.bf16.mxu0 0
      %499 = vmatmul.mubr.bf16.gmra.mrb[0].mxu0 %v384
      %v500 = vpop.f32.mrb[0].mxu0
      %v501 = vadd.f32 %v267, %v500
      %v502 = vpop.f32.mrb[0].mxu0
      %v503 = vpop.f32.mrb[0].mxu0
      %v504 = vadd.f32 %v267, %v503
      %v505 = vpop.f32.mrb[0].mxu0
      %506 = vmatprep.mubr.bf16.mxu0 0
      %507 = vmatmul.mubr.bf16.gmra.mrb[0].mxu0 %v387
      %v508 = vpop.f32.mrb[0].mxu0
      %v509 = vadd.f32 %v267, %v508
      %v510 = vpop.f32.mrb[0].mxu0
      %v511 = vpop.f32.mrb[0].mxu0
      %v512 = vadd.f32 %v267, %v511
      %v513 = vpop.f32.mrb[0].mxu0
      %514 = vmatprep.mubr.bf16.mxu0 0
      %515 = vmatmul.mubr.bf16.gmra.mrb[0].mxu0 %v390
      %v516 = vpop.f32.mrb[0].mxu0
      %v517 = vadd.f32 %v267, %v516
      %v518 = vpop.f32.mrb[0].mxu0
      %v519 = vpop.f32.mrb[0].mxu0
      %v520 = vadd.f32 %v267, %v519
      %v521 = vpop.f32.mrb[0].mxu0
      %522 = vmatprep.mubr.bf16.mxu0 0
      %523 = vmatmul.mubr.bf16.gmra.mrb[0].mxu0 %v393
      %v524 = vpop.f32.mrb[0].mxu0
      %v525 = vadd.f32 %v267, %v524
      %v526 = vpop.f32.mrb[0].mxu0
      %v527 = vpop.f32.mrb[0].mxu0
      %v528 = vadd.f32 %v267, %v527
      %v529 = vpop.f32.mrb[0].mxu0
      %530 = vmatprep.mubr.bf16.mxu0 0
      %531 = vmatmul.mubr.bf16.gmra.mrb[0].mxu0 %v396
      %v532 = vpop.f32.mrb[0].mxu0
      %v533 = vadd.f32 %v267, %v532
      %v534 = vpop.f32.mrb[0].mxu0
      %v535 = vpop.f32.mrb[0].mxu0
      %v536 = vadd.f32 %v267, %v535
      %v537 = vpop.f32.mrb[0].mxu0
      %538 = vmatprep.mubr.bf16.mxu0 0
      %539 = vmatmul.mubr.bf16.gmra.mrb[0].mxu0 %v399
      %v540 = vpop.f32.mrb[0].mxu0
      %v541 = vadd.f32 %v267, %v540
      %v542 = vpop.f32.mrb[0].mxu0
      %v543 = vpop.f32.mrb[0].mxu0
      %v544 = vadd.f32 %v267, %v543
      %v545 = vpop.f32.mrb[0].mxu0
      %546 = vmatprep.mubr.bf16.mxu0 0
      %547 = vmatmul.mubr.bf16.gmra.mrb[0].mxu0 %v402
      %v548 = vpop.f32.mrb[0].mxu0
      %v549 = vadd.f32 %v267, %v548
      %v550 = vpop.f32.mrb[0].mxu0
      %v551 = vpop.f32.mrb[0].mxu0
      %v552 = vadd.f32 %v267, %v551
      %v553 = vpop.f32.mrb[0].mxu0
      %554 = vmatprep.mubr.bf16.mxu0 0
      %555 = vmatmul.mubr.bf16.gmra.mrb[0].mxu0 %v405
      %v556 = vpop.f32.mrb[0].mxu0
      %v557 = vadd.f32 %v267, %v556
      %v558 = vpop.f32.mrb[0].mxu0
      %v559 = vpop.f32.mrb[0].mxu0
      %v560 = vadd.f32 %v267, %v559
      %v561 = vpop.f32.mrb[0].mxu0
      %562 = vmatprep.mubr.bf16.mxu0 0
      %563 = vmatmul.mubr.bf16.gmra.mrb[0].mxu0 %v408
      %v564 = vpop.f32.mrb[0].mxu0
      %v565 = vadd.f32 %v267, %v564
      %v566 = vpop.f32.mrb[0].mxu0
      %v567 = vpop.f32.mrb[0].mxu0
      %v568 = vadd.f32 %v267, %v567
      %v569 = vpop.f32.mrb[0].mxu0
      %570 = vdwg.mxu0
      %vm571 = vcmask 130048
      %572 = vst.msk [vmem:[%s223] sm:$0xff] %vm571, %v445
      %573 = vst.msk [vmem:[%s223 + $0x8] sm:$0xff] %vm571, %v448
      %574 = vst.msk [vmem:[%s223 + $0x10] sm:$0xff] %vm571, %v453
      %575 = vst.msk [vmem:[%s223 + $0x18] sm:$0xff] %vm571, %v456
      %576 = vst.msk [vmem:[%s223 + $0x20] sm:$0xff] %vm571, %v461
      %577 = vst.msk [vmem:[%s223 + $0x28] sm:$0xff] %vm571, %v464
      %578 = vst.msk [vmem:[%s223 + $0x30] sm:$0xff] %vm571, %v469
      %579 = vst.msk [vmem:[%s223 + $0x38] sm:$0xff] %vm571, %v472
      %580 = vst.msk [vmem:[%s223 + $0x40] sm:$0xff] %vm571, %v477
      %581 = vst.msk [vmem:[%s223 + $0x48] sm:$0xff] %vm571, %v480
      %582 = vst.msk [vmem:[%s223 + $0x50] sm:$0xff] %vm571, %v485
      %583 = vst.msk [vmem:[%s223 + $0x58] sm:$0xff] %vm571, %v488
      %584 = vst.msk [vmem:[%s223 + $0x60] sm:$0xff] %vm571, %v493
      %585 = vst.msk [vmem:[%s223 + $0x68] sm:$0xff] %vm571, %v496
      %586 = vst.msk [vmem:[%s223 + $0x70] sm:$0xff] %vm571, %v501
      %587 = vst.msk [vmem:[%s223 + $0x78] sm:$0xff] %vm571, %v504
      %588 = vst.msk [vmem:[%s223 + $0x80] sm:$0xff] %vm571, %v509
      %589 = vst.msk [vmem:[%s223 + $0x88] sm:$0xff] %vm571, %v512
      %590 = vst.msk [vmem:[%s223 + $0x90] sm:$0xff] %vm571, %v517
      %591 = vst.msk [vmem:[%s223 + $0x98] sm:$0xff] %vm571, %v520
      %592 = vst.msk [vmem:[%s223 + $0xa0] sm:$0xff] %vm571, %v525
      %593 = vst.msk [vmem:[%s223 + $0xa8] sm:$0xff] %vm571, %v528
      %594 = vst.msk [vmem:[%s223 + $0xb0] sm:$0xff] %vm571, %v533
      %595 = vst.msk [vmem:[%s223 + $0xb8] sm:$0xff] %vm571, %v536
      %596 = vst.msk [vmem:[%s223 + $0xc0] sm:$0xff] %vm571, %v541
      %597 = vst.msk [vmem:[%s223 + $0xc8] sm:$0xff] %vm571, %v544
      %598 = vst.msk [vmem:[%s223 + $0xd0] sm:$0xff] %vm571, %v549
      %599 = vst.msk [vmem:[%s223 + $0xd8] sm:$0xff] %vm571, %v552
      %600 = vst.msk [vmem:[%s223 + $0xe0] sm:$0xff] %vm571, %v557
      %601 = vst.msk [vmem:[%s223 + $0xe8] sm:$0xff] %vm571, %v560
      %602 = vst.msk [vmem:[%s223 + $0xf0] sm:$0xff] %vm571, %v565
      %603 = vst.msk [vmem:[%s223 + $0xf8] sm:$0xff] %vm571, %v568
      %s604 = smul.u32 32, %s18
      %p605 = scmp.lt.s32.totalorder %s604, 127
      %s606 = scalar_select %p605, %s604, 127
      %p607 = scmp.lt.s32.totalorder %s19, 0
      %s608 = scalar_select %p607, %s19, 0
      %s609 = sadd.s32 %s608, %s606
      %s610 = smul.addr %s609, 8
      %s611 = scalar_lea.vmem %s3, %s610
      // Predicated region
      $region33: #{tpu_custom_call.1} parent=31 // pred_check
        %p612 = pneg %p124
      $region34: #{tpu_custom_call.1} parent=31 // pred_check_branch
        %614 = sbr.rel (%p612) target = $region36
      $region35: #{tpu_custom_call.1} parent=31 // pred_region
        %s615 = smul.u32 32, %s18
      $region36: #{tpu_custom_call.1} parent=31 // pred_fallthru
        _
    $region32: #{tpu_custom_call.1} parent=5 // pred_fallthru
      _
    %p616 = scmp.le.s32.totalorder 2, %s9
    // Predicated region
    $region37: #{tpu_custom_call.1} parent=5 // pred_check
      %p617 = pneg %p616
    $region38: #{tpu_custom_call.1} parent=5 // pred_check_branch
      %619 = sbr.rel (%p617) target = $region40
    $region39: #{tpu_custom_call.1} parent=5 // pred_region
      %s620 = ssub.s32 %s9, 2
      // Predicated region
      $region41: #{tpu_custom_call.1} parent=39 // pred_check
        %p621 = pneg %p130
      $region42: #{tpu_custom_call.1} parent=39 // pred_check_branch
        %623 = sbr.rel (%p621) target = $region44
      $region43: #{tpu_custom_call.1} parent=39 // pred_region
        %s624 = smul.u32 32, %s20
        %p625 = scmp.lt.s32.totalorder %s624, 127
        %s626 = scalar_select %p625, %s624, 127
        %p627 = scmp.lt.s32.totalorder %s21, 0
        %s628 = scalar_select %p627, %s21, 0
        %s629 = sadd.s32 %s628, %s626
        %s630 = smul.addr %s629, 8
        %s631 = scalar_lea.vmem %s3, %s630
      $region44: #{tpu_custom_call.1} parent=39 // pred_fallthru
        _
    $region40: #{tpu_custom_call.1} parent=5 // pred_fallthru
      _
  $region6: #{tpu_custom_call.1} parent=0 // loop_footer
    %s13 = sadd.s32 1, %s9
  $region7: #{tpu_custom_call.1} parent=0 // loop_footer_branch
    %8 = sbr.rel target = $region3
  $region8: #{tpu_custom_call.1} parent=0 // loop_exit
    _

// kernel: tpu_custom_call.1
$region0: #{tpu_custom_call.1}
  #allocation0 [shape = 'u32[]', space=smem, size = 0x4, offset = 0x4, fixed_abs, tag = 'smem constant byte address 0x4 - core index']
  #allocation1 [shape = 'u32[144,128]{1,0:T(1,128)}', space=vmem, size = 0x12000, scoped, tag = 'internal scratch']
  %s0 = inlined_call_operand.vmem [shape: bf16[1024,32], index: 0, kind: input, shape index: {}]
  %s1 = inlined_call_operand.vmem [shape: bf16[32,16], index: 1, kind: input, shape index: {}]
  %s2 = inlined_call_operand.vmem [shape: f32[1,16], index: 2, kind: input, shape index: {}]
  %s3 = inlined_call_operand.vmem [shape: f32[1024,16], index: 3, kind: output, shape index: {}]
  %s4 = sld [smem:[#allocation0]]
  $region45: #{tpu_custom_call.1} parent=0
    _
  %s6 = ssub.s32 1, %s4
  %s7 = scalar_select 0, %s6, %s4
  loop: start=0, step=1, limit=6
  $region2: #{tpu_custom_call.1} parent=0 // loop_pre_header
    _
  $region3: #{tpu_custom_call.1} parent=0 // loop_header
    %s9 = sphi 0, %s13
    %p10 = scmp.ge.s32.totalorder %s9, 6
    %s16 = sphi 0, %s28
    %s17 = sphi 0, %s24
    %s18 = sphi 0, %s16
    %s19 = sphi 0, %s17
    %s20 = sphi 0, %s18
    %s21 = sphi 0, %s19
    %s31 = sphi 0, %s33
    %s34 = sphi 0, %s31
    %s35 = sphi 0, %s34
    %s51 = sphi 0, %s35
    %s57 = sphi 0, %s59
    %s60 = sphi 0, %s57
    %s61 = sphi 0, %s60
    %s77 = sphi 0, %s61
    %s83 = sphi 0, %s85
    %s86 = sphi 0, %s83
    %s87 = sphi 0, %s86
    %s103 = sphi 0, %s87
    %s111 = sphi 0, %s113
    %s114 = sphi 0, %s111
    %s115 = sphi 0, %s114
    %s131 = sphi 0, %s115
  $region4: #{tpu_custom_call.1} parent=0 // loop_header_branch
    %12 = sbr.rel (%p10) target = $region8
  $region5: #{tpu_custom_call.1} parent=0 // loop_body
    %s14 = ssub.s32 %s9, 1
    %s15 = ssub.s32 %s9, 2
    %s22 = sadd.s32 1, %s17
    %p23 = scmp.ge.s32.totalorder %s22, 1
    %s24 = scalar_select %p23, 0, %s22
    %s25 = sadd.s32 1, %s16
    %s26 = scalar_select %p23, %s25, %s16
    %p27 = scmp.ge.s32.totalorder %s26, 4
    %s28 = scalar_select %p27, 0, %s26
    %s29 = ssub.s32 %s16, %s28
    %p30 = scmp.eq.s32.totalorder %s29, 0
    %s32 = sadd.s32 %s31, 1
    %s33 = scalar_select %p30, %s31, %s32
    %p36 = pneg %p30
    %p37 = scmp.eq.s32.totalorder %s9, 3
    %p38 = por %p36, %p37
    %p39 = scmp.ne.s32.totalorder %s31, %s34
    %p40 = scmp.eq.s32.totalorder %s9, 0
    %p41 = por %p39, %p40
    %p42 = scmp.ne.s32.totalorder %s31, %s34
    %p43 = scmp.eq.s32.totalorder %s14, 3
    %p44 = por %p42, %p43
    %p45 = scmp.ne.s32.totalorder %s34, %s35
    %p46 = scmp.eq.s32.totalorder %s14, 0
    %p47 = por %p45, %p46
    %p48 = scmp.ne.s32.totalorder %s34, %s35
    %p49 = scmp.eq.s32.totalorder %s15, 3
    %p50 = por %p48, %p49
    %p52 = scmp.ne.s32.totalorder %s35, %s51
    %p53 = scmp.eq.s32.totalorder %s15, 0
    %p54 = por %p52, %p53
    %s55 = ssub.s32 %s17, %s24
    %p56 = scmp.eq.s32.totalorder %s55, 0
    %s58 = sadd.s32 %s57, 1
    %s59 = scalar_select %p56, %s57, %s58
    %p62 = pneg %p56
    %p63 = scmp.eq.s32.totalorder %s9, 3
    %p64 = por %p62, %p63
    %p65 = scmp.ne.s32.totalorder %s57, %s60
    %p66 = scmp.eq.s32.totalorder %s9, 0
    %p67 = por %p65, %p66
    %p68 = scmp.ne.s32.totalorder %s57, %s60
    %p69 = scmp.eq.s32.totalorder %s14, 3
    %p70 = por %p68, %p69
    %p71 = scmp.ne.s32.totalorder %s60, %s61
    %p72 = scmp.eq.s32.totalorder %s14, 0
    %p73 = por %p71, %p72
    %p74 = scmp.ne.s32.totalorder %s60, %s61
    %p75 = scmp.eq.s32.totalorder %s15, 3
    %p76 = por %p74, %p75
    %p78 = scmp.ne.s32.totalorder %s61, %s77
    %p79 = scmp.eq.s32.totalorder %s15, 0
    %p80 = por %p78, %p79
    %s81 = ssub.s32 %s17, %s24
    %p82 = scmp.eq.s32.totalorder %s81, 0
    %s84 = sadd.s32 %s83, 1
    %s85 = scalar_select %p82, %s83, %s84
    %p88 = pneg %p82
    %p89 = scmp.eq.s32.totalorder %s9, 3
    %p90 = por %p88, %p89
    %p91 = scmp.ne.s32.totalorder %s83, %s86
    %p92 = scmp.eq.s32.totalorder %s9, 0
    %p93 = por %p91, %p92
    %p94 = scmp.ne.s32.totalorder %s83, %s86
    %p95 = scmp.eq.s32.totalorder %s14, 3
    %p96 = por %p94, %p95
    %p97 = scmp.ne.s32.totalorder %s86, %s87
    %p98 = scmp.eq.s32.totalorder %s14, 0
    %p99 = por %p97, %p98
    %p100 = scmp.ne.s32.totalorder %s86, %s87
    %p101 = scmp.eq.s32.totalorder %s15, 3
    %p102 = por %p100, %p101
    %p104 = scmp.ne.s32.totalorder %s87, %s103
    %p105 = scmp.eq.s32.totalorder %s15, 0
    %p106 = por %p104, %p105
    %s107 = ssub.s32 %s16, %s28
    %s108 = ssub.s32 %s17, %s24
    %s109 = sor.u32 %s107, %s108
    %p110 = scmp.eq.s32.totalorder %s109, 0
    %s112 = sadd.s32 %s111, 1
    %s113 = scalar_select %p110, %s111, %s112
    %p116 = pneg %p110
    %p117 = scmp.eq.s32.totalorder %s9, 3
    %p118 = por %p116, %p117
    %p119 = scmp.ne.s32.totalorder %s111, %s114
    %p120 = scmp.eq.s32.totalorder %s9, 0
    %p121 = por %p119, %p120
    %p122 = scmp.ne.s32.totalorder %s111, %s114
    %p123 = scmp.eq.s32.totalorder %s14, 3
    %p124 = por %p122, %p123
    %p125 = scmp.ne.s32.totalorder %s114, %s115
    %p126 = scmp.eq.s32.totalorder %s14, 0
    %p127 = por %p125, %p126
    %p128 = scmp.ne.s32.totalorder %s114, %s115
    %p129 = scmp.eq.s32.totalorder %s15, 3
    %p130 = por %p128, %p129
    %p132 = scmp.ne.s32.totalorder %s115, %s131
    %p133 = scmp.eq.s32.totalorder %s15, 0
    %p134 = por %p132, %p133
    %p135 = scmp.le.s32.totalorder 1, %s9
    %p136 = scmp.lt.s32.totalorder %s9, 5
    %p137 = pnand %p135, %p136
    %p138 = pneg %p137
    // Predicated region
    $region9: #{tpu_custom_call.1} parent=5 // pred_check
      _
    $region10: #{tpu_custom_call.1} parent=5 // pred_check_branch
      %140 = sbr.rel (%p137) target = $region12
    $region11: #{tpu_custom_call.1} parent=5 // pred_region
      %s141 = ssub.s32 %s9, 1
      // Predicated region
      $region13: #{tpu_custom_call.1} parent=11 // pred_check
        %p142 = pneg %p73
      $region14: #{tpu_custom_call.1} parent=11 // pred_check_branch
        %144 = sbr.rel (%p142) target = $region16
      $region15: #{tpu_custom_call.1} parent=11 // pred_region
        %p145 = scmp.lt.s32.totalorder %s19, 0
        %s146 = scalar_select %p145, %s19, 0
        %s147 = smul.addr %s146, 4
        %s148 = scalar_lea.vmem %s1, %s147
      $region16: #{tpu_custom_call.1} parent=11 // pred_fallthru
        _
      // Predicated region
      $region17: #{tpu_custom_call.1} parent=11 // pred_check
        %p149 = pneg %p99
      $region18: #{tpu_custom_call.1} parent=11 // pred_check_branch
        %151 = sbr.rel (%p149) target = $region20
      $region19: #{tpu_custom_call.1} parent=11 // pred_region
        %p152 = scmp.lt.s32.totalorder %s19, 0
        %s153 = scalar_select %p152, %s19, 0
        %s154 = scalar_lea.vmem %s2, %s153
      $region20: #{tpu_custom_call.1} parent=11 // pred_fallthru
        _
    $region12: #{tpu_custom_call.1} parent=5 // pred_fallthru
      _
    %p155 = scmp.lt.s32.totalorder %s9, 4
    // Predicated region
    $region21: #{tpu_custom_call.1} parent=5 // pred_check
      %p156 = pneg %p155
    $region22: #{tpu_custom_call.1} parent=5 // pred_check_branch
      %158 = sbr.rel (%p156) target = $region24
    $region23: #{tpu_custom_call.1} parent=5 // pred_region
      // Predicated region
      $region25: #{tpu_custom_call.1} parent=23 // pred_check
        %p159 = pneg %p41
      $region26: #{tpu_custom_call.1} parent=23 // pred_check_branch
        %161 = sbr.rel (%p159) target = $region28
      $region27: #{tpu_custom_call.1} parent=23 // pred_region
        %s162 = smul.u32 32, %s16
        %p163 = scmp.lt.s32.totalorder %s162, 127
        %s164 = scalar_select %p163, %s162, 127
        %s165 = smul.addr %s164, 4
        %s166 = scalar_lea.vmem %s0, %s165
        %s167 = smul.u32 32, %s16
      $region28: #{tpu_custom_call.1} parent=23 // pred_fallthru
        _
    $region24: #{tpu_custom_call.1} parent=5 // pred_fallthru
      _
    %p168 = scmp.le.s32.totalorder 1, %s9
    %p169 = scmp.lt.s32.totalorder %s9, 5
    %p170 = pnand %p168, %p169
    %p171 = pneg %p170
    // Predicated region
    $region29: #{tpu_custom_call.1} parent=5 // pred_check
      _
    $region30: #{tpu_custom_call.1} parent=5 // pred_check_branch
      %173 = sbr.rel (%p170) target = $region32
    $region31: #{tpu_custom_call.1} parent=5 // pred_region
      %s174 = ssub.s32 %s9, 1
      %s175 = smul.u32 32, %s18
      %p176 = scmp.lt.s32.totalorder %s175, 127
      %s177 = scalar_select %p176, %s175, 127
      %s178 = smul.addr %s177, 4
      %s179 = scalar_lea.vmem %s0, %s178
      %p180 = pneg %p47
      %p181 = pneg %p44
      %p182 = scmp.lt.s32.totalorder %s19, 0
      %s183 = scalar_select %p182, %s19, 0
      %s184 = smul.addr %s183, 4
      %s185 = scalar_lea.vmem %s1, %s184
      %p186 = pneg %p73
      %p187 = pneg %p70
      %p188 = scmp.lt.s32.totalorder %s19, 0
      %s189 = scalar_select %p188, %s19, 0
      %s190 = scalar_lea.vmem %s2, %s189
      %p191 = pneg %p99
      %p192 = pneg %p96
      %p193 = pneg %p127
      %p194 = pneg %p124
      %s195 = smul.u32 32, %s18
      %p196 = scmp.lt.s32.totalorder %s195, 127
      %s197 = scalar_select %p196, %s195, 127
      %p198 = scmp.lt.s32.totalorder %s19, 0
      %s199 = scalar_select %p198, %s19, 0
      %s200 = sadd.s32 %s199, %s197
      %s201 = smul.addr %s200, 8
      %s202 = scalar_lea.vmem %s3, %s201
      %s203 = smul.u32 32, %s18
      %p204 = scmp.lt.s32.totalorder %s203, 127
      %s205 = scalar_select %p204, %s203, 127
      %s206 = smul.addr %s205, 4
      %s207 = scalar_lea.vmem %s0, %s206
      %s208 = smul.u32 32, %s18
      %p209 = scmp.lt.s32.totalorder %s19, 0
      %s210 = scalar_select %p209, %s19, 0
      %s211 = smul.addr %s210, 4
      %s212 = scalar_lea.vmem %s1, %s211
      %p213 = scmp.lt.s32.totalorder %s19, 0
      %s214 = scalar_select %p213, %s19, 0
      %s215 = scalar_lea.vmem %s2, %s214
      %s216 = smul.u32 32, %s18
      %p217 = scmp.lt.s32.totalorder %s216, 127
      %s218 = scalar_select %p217, %s216, 127
      %p219 = scmp.lt.s32.totalorder %s19, 0
      %s220 = scalar_select %p219, %s19, 0
      %s221 = sadd.s32 %s220, %s218
      %s222 = smul.addr %s221, 8
      %s223 = scalar_lea.vmem %s3, %s222
      %s224 = smul.u32 32, %s18
      %v226 = vld [vmem:[%s207] sm:$0xf]
      %v227 = vld [vmem:[%s207 + $0x4] sm:$0xf]
      %v228 = vld [vmem:[%s207 + $0x8] sm:$0xf]
      %v229 = vld [vmem:[%s207 + $0xc] sm:$0xf]
      %v230 = vld [vmem:[%s207 + $0x10] sm:$0xf]
      %v231 = vld [vmem:[%s207 + $0x14] sm:$0xf]
      %v232 = vld [vmem:[%s207 + $0x18] sm:$0xf]
      %v233 = vld [vmem:[%s207 + $0x1c] sm:$0xf]
      %v234 = vld [vmem:[%s207 + $0x20] sm:$0xf]
      %v235 = vld [vmem:[%s207 + $0x24] sm:$0xf]
      %v236 = vld [vmem:[%s207 + $0x28] sm:$0xf]
      %v237 = vld [vmem:[%s207 + $0x2c] sm:$0xf]
      %v238 = vld [vmem:[%s207 + $0x30] sm:$0xf]
      %v239 = vld [vmem:[%s207 + $0x34] sm:$0xf]
      %v240 = vld [vmem:[%s207 + $0x38] sm:$0xf]
      %v241 = vld [vmem:[%s207 + $0x3c] sm:$0xf]
      %v242 = vld [vmem:[%s207 + $0x40] sm:$0xf]
      %v243 = vld [vmem:[%s207 + $0x44] sm:$0xf]
      %v244 = vld [vmem:[%s207 + $0x48] sm:$0xf]
      %v245 = vld [vmem:[%s207 + $0x4c] sm:$0xf]
      %v246 = vld [vmem:[%s207 + $0x50] sm:$0xf]
      %v247 = vld [vmem:[%s207 + $0x54] sm:$0xf]
      %v248 = vld [vmem:[%s207 + $0x58] sm:$0xf]
      %v249 = vld [vmem:[%s207 + $0x5c] sm:$0xf]
      %v250 = vld [vmem:[%s207 + $0x60] sm:$0xf]
      %v251 = vld [vmem:[%s207 + $0x64] sm:$0xf]
      %v252 = vld [vmem:[%s207 + $0x68] sm:$0xf]
      %v253 = vld [vmem:[%s207 + $0x6c] sm:$0xf]
      %v254 = vld [vmem:[%s207 + $0x70] sm:$0xf]
      %v255 = vld [vmem:[%s207 + $0x74] sm:$0xf]
      %v256 = vld [vmem:[%s207 + $0x78] sm:$0xf]
      %v257 = vld [vmem:[%s207 + $0x7c] sm:$0xf]
      %v258 = vld [vmem:[%s212] sm:$0xf]
      %v259 = vld [vmem:[%s212 + $0x4] sm:$0xf]
      %v260 = vld [vmem:[%s212 + $0x8] sm:$0xf]
      %v261 = vld [vmem:[%s212 + $0xc] sm:$0xf]
      %v262 = vld [vmem:[%s215] sm:$0x1]
      %v264 = vlaneseq
      %v265 = vshrl.u32 %v264, 7
      %v266 = vsub.s32 0, %v265
      %v267 = vrot.slane %v262, %v266
      %v301 = vunpack.c.l.b16 %v226
      %v302 = vunpack.c.l.b16 %v227
      %v303 = vunpack.c.l.b16 %v228
      %v304 = vunpack.c.l.b16 %v229
      %v305 = vunpack.c.l.b16 %v230
      %v306 = vunpack.c.l.b16 %v231
      %v307 = vunpack.c.l.b16 %v232
      %v308 = vunpack.c.l.b16 %v233
      %v309 = vunpack.c.l.b16 %v234
      %v310 = vunpack.c.l.b16 %v235
      %v311 = vunpack.c.l.b16 %v236
      %v312 = vunpack.c.l.b16 %v237
      %v313 = vunpack.c.l.b16 %v238
      %v314 = vunpack.c.l.b16 %v239
      %v315 = vunpack.c.l.b16 %v240
      %v316 = vunpack.c.l.b16 %v241
      %v317 = vunpack.c.l.b16 %v242
      %v318 = vunpack.c.l.b16 %v243
      %v319 = vunpack.c.l.b16 %v244
      %v320 = vunpack.c.l.b16 %v245
      %v321 = vunpack.c.l.b16 %v246
      %v322 = vunpack.c.l.b16 %v247
      %v323 = vunpack.c.l.b16 %v248
      %v324 = vunpack.c.l.b16 %v249
      %v325 = vunpack.c.l.b16 %v250
      %v326 = vunpack.c.l.b16 %v251
      %v327 = vunpack.c.l.b16 %v252
      %v328 = vunpack.c.l.b16 %v253
      %v329 = vunpack.c.l.b16 %v254
      %v330 = vunpack.c.l.b16 %v255
      %v331 = vunpack.c.l.b16 %v256
      %v332 = vunpack.c.l.b16 %v257
      %v333 = vpack.c.b16 %v302, %v301
      %v334 = vpack.c.b16 %v304, %v303
      %v335 = vpack.c.b16 %v306, %v305
      %v336 = vpack.c.b16 %v308, %v307
      %v337 = vpack.c.b16 %v310, %v309
      %v338 = vpack.c.b16 %v312, %v311
      %v339 = vpack.c.b16 %v314, %v313
      %v340 = vpack.c.b16 %v316, %v315
      %v341 = vpack.c.b16 %v318, %v317
      %v342 = vpack.c.b16 %v320, %v319
      %v343 = vpack.c.b16 %v322, %v321
      %v344 = vpack.c.b16 %v324, %v323
      %v345 = vpack.c.b16 %v326, %v325
      %v346 = vpack.c.b16 %v328, %v327
      %v347 = vpack.c.b16 %v330, %v329
      %v348 = vpack.c.b16 %v332, %v331
      %v353 = vunpack.c.l.b16 %v258
      %v354 = vunpack.c.l.b16 %v259
      %v355 = vunpack.c.l.b16 %v260
      %v356 = vunpack.c.l.b16 %v261
      %v357 = vpack.c.b16 %v354, %v353
      %v358 = vpack.c.b16 %v356, %v355
      %vm361 = vcmask 261120
      %v363 = vsel %vm361, %v333, 0
      %v366 = vsel %vm361, %v334, 0
      %v369 = vsel %vm361, %v335, 0
      %v372 = vsel %vm361, %v336, 0
      %v375 = vsel %vm361, %v337, 0
      %v378 = vsel %vm361, %v338, 0
      %v381 = vsel %vm361, %v339, 0
      %v384 = vsel %vm361, %v340, 0
      %v387 = vsel %vm361, %v341, 0
      %v390 = vsel %vm361, %v342, 0
      %v393 = vsel %vm361, %v343, 0
      %v396 = vsel %vm361, %v344, 0
      %v399 = vsel %vm361, %v345, 0
      %v402 = vsel %vm361, %v346, 0
      %v405 = vsel %vm361, %v347, 0
      %v408 = vsel %vm361, %v348, 0
      %410 = vmatprep.subr.bf16.mxu0 0
      %411 = vmatpush1.bf16.msra.mxu0 %v357
      %412 = vmatprep.subr.bf16.mxu0 0
      %413 = vmatpush1.bf16.msra.mxu0 %v358
      %414 = vmatprep.subr.bf16.mxu0 0
      %415 = vmatpush1.bf16.msra.mxu0 0
      %416 = vmatprep.subr.bf16.mxu0 0
      %417 = vmatpush1.bf16.msra.mxu0 0
      %418 = vmatprep.subr.bf16.mxu0 0
      %419 = vmatpush1.bf16.msra.mxu0 0
      %420 = vmatprep.subr.bf16.mxu0 0
      %421 = vmatpush1.bf16.msra.mxu0 0
      %422 = vmatprep.subr.bf16.mxu0 0
      %423 = vmatpush1.bf16.msra.mxu0 0
      %424 = vmatprep.subr.bf16.mxu0 0
      %425 = vmatpush1.bf16.msra.mxu0 0
      %426 = vmatprep.subr.bf16.mxu0 0
      %427 = vmatpush1.bf16.msra.mxu0 0
      %428 = vmatprep.subr.bf16.mxu0 0
      %429 = vmatpush1.bf16.msra.mxu0 0
      %430 = vmatprep.subr.bf16.mxu0 0
      %431 = vmatpush1.bf16.msra.mxu0 0
      %432 = vmatprep.subr.bf16.mxu0 0
      %433 = vmatpush1.bf16.msra.mxu0 0
      %434 = vmatprep.subr.bf16.mxu0 0
      %435 = vmatpush1.bf16.msra.mxu0 0
      %436 = vmatprep.subr.bf16.mxu0 0
      %437 = vmatpush1.bf16.msra.mxu0 0
      %438 = vmatprep.subr.bf16.mxu0 0
      %439 = vmatpush1.bf16.msra.mxu0 0
      %440 = vmatprep.subr.bf16.mxu0 0
      %441 = vmatpush1.bf16.msra.mxu0 0
      %442 = vmatprep.mubr.bf16.mxu0 0
      %443 = vmatmul.mubr.bf16.gmra.mrb[0].mxu0 %v363
      %v444 = vpop.f32.mrb[0].mxu0
      %v445 = vadd.f32 %v267, %v444
      %v446 = vpop.f32.mrb[0].mxu0
      %v447 = vpop.f32.mrb[0].mxu0
      %v448 = vadd.f32 %v267, %v447
      %v449 = vpop.f32.mrb[0].mxu0
      %450 = vmatprep.mubr.bf16.mxu0 0
      %451 = vmatmul.mubr.bf16.gmra.mrb[0].mxu0 %v366
      %v452 = vpop.f32.mrb[0].mxu0
      %v453 = vadd.f32 %v267, %v452
      %v454 = vpop.f32.mrb[0].mxu0
      %v455 = vpop.f32.mrb[0].mxu0
      %v456 = vadd.f32 %v267, %v455
      %v457 = vpop.f32.mrb[0].mxu0
      %458 = vmatprep.mubr.bf16.mxu0 0
      %459 = vmatmul.mubr.bf16.gmra.mrb[0].mxu0 %v369
      %v460 = vpop.f32.mrb[0].mxu0
      %v461 = vadd.f32 %v267, %v460
      %v462 = vpop.f32.mrb[0].mxu0
      %v463 = vpop.f32.mrb[0].mxu0
      %v464 = vadd.f32 %v267, %v463
      %v465 = vpop.f32.mrb[0].mxu0
      %466 = vmatprep.mubr.bf16.mxu0 0
      %467 = vmatmul.mubr.bf16.gmra.mrb[0].mxu0 %v372
      %v468 = vpop.f32.mrb[0].mxu0
      %v469 = vadd.f32 %v267, %v468
      %v470 = vpop.f32.mrb[0].mxu0
      %v471 = vpop.f32.mrb[0].mxu0
      %v472 = vadd.f32 %v267, %v471
      %v473 = vpop.f32.mrb[0].mxu0
      %474 = vmatprep.mubr.bf16.mxu0 0
      %475 = vmatmul.mubr.bf16.gmra.mrb[0].mxu0 %v375
      %v476 = vpop.f32.mrb[0].mxu0
      %v477 = vadd.f32 %v267, %v476
      %v478 = vpop.f32.mrb[0].mxu0
      %v479 = vpop.f32.mrb[0].mxu0
      %v480 = vadd.f32 %v267, %v479
      %v481 = vpop.f32.mrb[0].mxu0
      %482 = vmatprep.mubr.bf16.mxu0 0
      %483 = vmatmul.mubr.bf16.gmra.mrb[0].mxu0 %v378
      %v484 = vpop.f32.mrb[0].mxu0
      %v485 = vadd.f32 %v267, %v484
      %v486 = vpop.f32.mrb[0].mxu0
      %v487 = vpop.f32.mrb[0].mxu0
      %v488 = vadd.f32 %v267, %v487
      %v489 = vpop.f32.mrb[0].mxu0
      %490 = vmatprep.mubr.bf16.mxu0 0
      %491 = vmatmul.mubr.bf16.gmra.mrb[0].mxu0 %v381
      %v492 = vpop.f32.mrb[0].mxu0
      %v493 = vadd.f32 %v267, %v492
      %v494 = vpop.f32.mrb[0].mxu0
      %v495 = vpop.f32.mrb[0].mxu0
      %v496 = vadd.f32 %v267, %v495
      %v497 = vpop.f32.mrb[0].mxu0
      %498 = vmatprep.mubr.bf16.mxu0 0
      %499 = vmatmul.mubr.bf16.gmra.mrb[0].mxu0 %v384
      %v500 = vpop.f32.mrb[0].mxu0
      %v501 = vadd.f32 %v267, %v500
      %v502 = vpop.f32.mrb[0].mxu0
      %v503 = vpop.f32.mrb[0].mxu0
      %v504 = vadd.f32 %v267, %v503
      %v505 = vpop.f32.mrb[0].mxu0
      %506 = vmatprep.mubr.bf16.mxu0 0
      %507 = vmatmul.mubr.bf16.gmra.mrb[0].mxu0 %v387
      %v508 = vpop.f32.mrb[0].mxu0
      %v509 = vadd.f32 %v267, %v508
      %v510 = vpop.f32.mrb[0].mxu0
      %v511 = vpop.f32.mrb[0].mxu0
      %v512 = vadd.f32 %v267, %v511
      %v513 = vpop.f32.mrb[0].mxu0
      %514 = vmatprep.mubr.bf16.mxu0 0
      %515 = vmatmul.mubr.bf16.gmra.mrb[0].mxu0 %v390
      %v516 = vpop.f32.mrb[0].mxu0
      %v517 = vadd.f32 %v267, %v516
      %v518 = vpop.f32.mrb[0].mxu0
      %v519 = vpop.f32.mrb[0].mxu0
      %v520 = vadd.f32 %v267, %v519
      %v521 = vpop.f32.mrb[0].mxu0
      %522 = vmatprep.mubr.bf16.mxu0 0
      %523 = vmatmul.mubr.bf16.gmra.mrb[0].mxu0 %v393
      %v524 = vpop.f32.mrb[0].mxu0
      %v525 = vadd.f32 %v267, %v524
      %v526 = vpop.f32.mrb[0].mxu0
      %v527 = vpop.f32.mrb[0].mxu0
      %v528 = vadd.f32 %v267, %v527
      %v529 = vpop.f32.mrb[0].mxu0
      %530 = vmatprep.mubr.bf16.mxu0 0
      %531 = vmatmul.mubr.bf16.gmra.mrb[0].mxu0 %v396
      %v532 = vpop.f32.mrb[0].mxu0
      %v533 = vadd.f32 %v267, %v532
      %v534 = vpop.f32.mrb[0].mxu0
      %v535 = vpop.f32.mrb[0].mxu0
      %v536 = vadd.f32 %v267, %v535
      %v537 = vpop.f32.mrb[0].mxu0
      %538 = vmatprep.mubr.bf16.mxu0 0
      %539 = vmatmul.mubr.bf16.gmra.mrb[0].mxu0 %v399
      %v540 = vpop.f32.mrb[0].mxu0
      %v541 = vadd.f32 %v267, %v540
      %v542 = vpop.f32.mrb[0].mxu0
      %v543 = vpop.f32.mrb[0].mxu0
      %v544 = vadd.f32 %v267, %v543
      %v545 = vpop.f32.mrb[0].mxu0
      %546 = vmatprep.mubr.bf16.mxu0 0
      %547 = vmatmul.mubr.bf16.gmra.mrb[0].mxu0 %v402
      %v548 = vpop.f32.mrb[0].mxu0
      %v549 = vadd.f32 %v267, %v548
      %v550 = vpop.f32.mrb[0].mxu0
      %v551 = vpop.f32.mrb[0].mxu0
      %v552 = vadd.f32 %v267, %v551
      %v553 = vpop.f32.mrb[0].mxu0
      %554 = vmatprep.mubr.bf16.mxu0 0
      %555 = vmatmul.mubr.bf16.gmra.mrb[0].mxu0 %v405
      %v556 = vpop.f32.mrb[0].mxu0
      %v557 = vadd.f32 %v267, %v556
      %v558 = vpop.f32.mrb[0].mxu0
      %v559 = vpop.f32.mrb[0].mxu0
      %v560 = vadd.f32 %v267, %v559
      %v561 = vpop.f32.mrb[0].mxu0
      %562 = vmatprep.mubr.bf16.mxu0 0
      %563 = vmatmul.mubr.bf16.gmra.mrb[0].mxu0 %v408
      %v564 = vpop.f32.mrb[0].mxu0
      %v565 = vadd.f32 %v267, %v564
      %v566 = vpop.f32.mrb[0].mxu0
      %v567 = vpop.f32.mrb[0].mxu0
      %v568 = vadd.f32 %v267, %v567
      %v569 = vpop.f32.mrb[0].mxu0
      %570 = vdwg.mxu0
      %vm571 = vcmask 130048
      %572 = vst.msk [vmem:[%s223] sm:$0xff] %vm571, %v445
      %573 = vst.msk [vmem:[%s223 + $0x8] sm:$0xff] %vm571, %v448
      %574 = vst.msk [vmem:[%s223 + $0x10] sm:$0xff] %vm571, %v453
      %575 = vst.msk [vmem:[%s223 + $0x18] sm:$0xff] %vm571, %v456
      %576 = vst.msk [vmem:[%s223 + $0x20] sm:$0xff] %vm571, %v461
      %577 = vst.msk [vmem:[%s223 + $0x28] sm:$0xff] %vm571, %v464
      %578 = vst.msk [vmem:[%s223 + $0x30] sm:$0xff] %vm571, %v469
      %579 = vst.msk [vmem:[%s223 + $0x38] sm:$0xff] %vm571, %v472
      %580 = vst.msk [vmem:[%s223 + $0x40] sm:$0xff] %vm571, %v477
      %581 = vst.msk [vmem:[%s223 + $0x48] sm:$0xff] %vm571, %v480
      %582 = vst.msk [vmem:[%s223 + $0x50] sm:$0xff] %vm571, %v485
      %583 = vst.msk [vmem:[%s223 + $0x58] sm:$0xff] %vm571, %v488
      %584 = vst.msk [vmem:[%s223 + $0x60] sm:$0xff] %vm571, %v493
      %585 = vst.msk [vmem:[%s223 + $0x68] sm:$0xff] %vm571, %v496
      %586 = vst.msk [vmem:[%s223 + $0x70] sm:$0xff] %vm571, %v501
      %587 = vst.msk [vmem:[%s223 + $0x78] sm:$0xff] %vm571, %v504
      %588 = vst.msk [vmem:[%s223 + $0x80] sm:$0xff] %vm571, %v509
      %589 = vst.msk [vmem:[%s223 + $0x88] sm:$0xff] %vm571, %v512
      %590 = vst.msk [vmem:[%s223 + $0x90] sm:$0xff] %vm571, %v517
      %591 = vst.msk [vmem:[%s223 + $0x98] sm:$0xff] %vm571, %v520
      %592 = vst.msk [vmem:[%s223 + $0xa0] sm:$0xff] %vm571, %v525
      %593 = vst.msk [vmem:[%s223 + $0xa8] sm:$0xff] %vm571, %v528
      %594 = vst.msk [vmem:[%s223 + $0xb0] sm:$0xff] %vm571, %v533
      %595 = vst.msk [vmem:[%s223 + $0xb8] sm:$0xff] %vm571, %v536
      %596 = vst.msk [vmem:[%s223 + $0xc0] sm:$0xff] %vm571, %v541
      %597 = vst.msk [vmem:[%s223 + $0xc8] sm:$0xff] %vm571, %v544
      %598 = vst.msk [vmem:[%s223 + $0xd0] sm:$0xff] %vm571, %v549
      %599 = vst.msk [vmem:[%s223 + $0xd8] sm:$0xff] %vm571, %v552
      %600 = vst.msk [vmem:[%s223 + $0xe0] sm:$0xff] %vm571, %v557
      %601 = vst.msk [vmem:[%s223 + $0xe8] sm:$0xff] %vm571, %v560
      %602 = vst.msk [vmem:[%s223 + $0xf0] sm:$0xff] %vm571, %v565
      %603 = vst.msk [vmem:[%s223 + $0xf8] sm:$0xff] %vm571, %v568
      %s604 = smul.u32 32, %s18
      %p605 = scmp.lt.s32.totalorder %s604, 127
      %s606 = scalar_select %p605, %s604, 127
      %p607 = scmp.lt.s32.totalorder %s19, 0
      %s608 = scalar_select %p607, %s19, 0
      %s609 = sadd.s32 %s608, %s606
      %s610 = smul.addr %s609, 8
      %s611 = scalar_lea.vmem %s3, %s610
      // Predicated region
      $region33: #{tpu_custom_call.1} parent=31 // pred_check
        %p612 = pneg %p124
      $region34: #{tpu_custom_call.1} parent=31 // pred_check_branch
        %614 = sbr.rel (%p612) target = $region36
      $region35: #{tpu_custom_call.1} parent=31 // pred_region
        %s615 = smul.u32 32, %s18
      $region36: #{tpu_custom_call.1} parent=31 // pred_fallthru
        _
    $region32: #{tpu_custom_call.1} parent=5 // pred_fallthru
      _
    %p616 = scmp.le.s32.totalorder 2, %s9
    // Predicated region
    $region37: #{tpu_custom_call.1} parent=5 // pred_check
      %p617 = pneg %p616
    $region38: #{tpu_custom_call.1} parent=5 // pred_check_branch
      %619 = sbr.rel (%p617) target = $region40
    $region39: #{tpu_custom_call.1} parent=5 // pred_region
      %s620 = ssub.s32 %s9, 2
      // Predicated region
      $region41: #{tpu_custom_call.1} parent=39 // pred_check
        %p621 = pneg %p130
      $region42: #{tpu_custom_call.1} parent=39 // pred_check_branch
        %623 = sbr.rel (%p621) target = $region44
      $region43: #{tpu_custom_call.1} parent=39 // pred_region
        %s624 = smul.u32 32, %s20
        %p625 = scmp.lt.s32.totalorder %s624, 127
        %s626 = scalar_select %p625, %s624, 127
        %p627 = scmp.lt.s32.totalorder %s21, 0
        %s628 = scalar_select %p627, %s21, 0
        %s629 = sadd.s32 %s628, %s626
        %s630 = smul.addr %s629, 8
        %s631 = scalar_lea.vmem %s3, %s630
      $region44: #{tpu_custom_call.1} parent=39 // pred_fallthru
        _
    $region40: #{tpu_custom_call.1} parent=5 // pred_fallthru
      _
  $region6: #{tpu_custom_call.1} parent=0 // loop_footer
    %s13 = sadd.s32 1, %s9
  $region7: #{tpu_custom_call.1} parent=0 // loop_footer_branch
    %8 = sbr.rel target = $region3
  $region8: #{tpu_custom_call.1} parent=0 // loop_exit
    _

</llo_original>
